<compile_context>
chip_gen: v7x
topology: tpu7x:2x2x1
jax: 0.10.0
libtpu: 0.0.40
codegen_flags: <defaults>
</compile_context>

<pallas_src>
import functools

import jax
import jax.numpy as jnp
from jax.experimental import pallas as pl
from jax.experimental.pallas import tpu as pltpu


# ---------------------------------------------------------------------------
# Kernels
# ---------------------------------------------------------------------------

def _crop_hbm_kernel(start_ref, x_hbm, o_hbm, sem, *, seq_len):
    """Single HBM->HBM DMA of rows [start, start+seq_len) of x into the output.

    start_ref : SMEM (1,) int32 -- crop start (scalar prefetch).
    x_hbm     : HBM ref (T, C).
    o_hbm     : HBM ref (seq_len, C).
    sem       : DMA completion semaphore.
    """
    start = start_ref[0]
    cp = pltpu.make_async_copy(x_hbm.at[pl.ds(start, seq_len), :], o_hbm, sem)
    cp.start()
    cp.wait()


def _pad_kernel(x_ref, o_ref, *, time_axis, zero_first):
    """Zero-pad the tail of the time axis inside one VMEM block.

    zero_first: statically chosen by the wrapper -- when the data/pad split is
    not tile-aligned, zero the whole block (one unmasked full-tile store) and
    overwrite the data region, instead of a masked partial store for the tail.
    """
    if zero_first:
        o_ref[...] = jnp.zeros_like(o_ref)
    if time_axis == 0:
        t = x_ref.shape[0]
        o_ref[pl.ds(0, t), :] = x_ref[...]
        if not zero_first:
            pad = o_ref.shape[0] - t
            o_ref[pl.ds(t, pad), :] = jnp.zeros((pad, o_ref.shape[1]), o_ref.dtype)
    else:
        t = x_ref.shape[1]
        o_ref[:, pl.ds(0, t)] = x_ref[...]
        if not zero_first:
            pad = o_ref.shape[1] - t
            o_ref[:, pl.ds(t, pad)] = jnp.zeros((o_ref.shape[0], pad), o_ref.dtype)


def _batched_crop_kernel(starts_ref, x_hbm, o_hbm, sems, *, seq_len, chunk, batch):
    """Per-sample crop for a chunk of `chunk` samples per grid step.

    All `chunk` HBM->HBM window copies are issued before any wait, so multiple
    DMAs stay in flight instead of one serialized start/wait per sample.
    """
    c = pl.program_id(0)
    base = c * chunk
    full = (batch % chunk == 0)      # static: every chunk is complete

    def window_copy(i):
        b = base + i
        return pltpu.make_async_copy(
            x_hbm.at[pl.ds(b, 1), pl.ds(starts_ref[b], seq_len), :],
            o_hbm.at[pl.ds(b, 1), :, :],
            sems.at[i])

    for i in range(chunk):
        if full:
            window_copy(i).start()
        else:
            @pl.when(base + i < batch)
            def _(i=i):
                window_copy(i).start()

    for i in range(chunk):
        if full:
            window_copy(i).wait()
        else:
            @pl.when(base + i < batch)
            def _(i=i):
                window_copy(i).wait()


def _batched_pad_kernel(x_ref, o_ref, *, zero_first):
    """x_ref (Bblk, T, C) VMEM, o_ref (Bblk, seq_len, C) VMEM; zero-pad the time axis."""
    t = x_ref.shape[1]
    if zero_first:
        o_ref[...] = jnp.zeros_like(o_ref)
        o_ref[:, pl.ds(0, t), :] = x_ref[...]
    else:
        pad = o_ref.shape[1] - t
        o_ref[:, pl.ds(0, t), :] = x_ref[...]
        o_ref[:, pl.ds(t, pad), :] = jnp.zeros(
            (o_ref.shape[0], pad, o_ref.shape[2]), o_ref.dtype)


# ---------------------------------------------------------------------------
# Helpers / wrappers
# ---------------------------------------------------------------------------

def _pad_slices_aligned(t, padlen, time_axis):
    """True if both the data region and the zero tail are tile-aligned on the
    time axis (sublane unit 8 when time is dim -2, lane unit 128 when dim -1)."""
    unit = 8 if time_axis == 0 else 128
    return (t % unit == 0) and (padlen % unit == 0)


def my_crop(x, seq_len, key):
    """Pallas implementation of MyCrop.forward for a single sequence.

    x: (T,) or (T, C). seq_len: static int. key: PRNG key (used when T > seq_len).
    Returns (seq_len,) or (seq_len, C), same dtype as x.
    """
    unsqueezed = x.ndim == 1
    assert x.ndim in (1, 2)
    T = x.shape[0]
    itemsize = x.dtype.itemsize

    # Identity case: no kernel launch, no HBM round trip.
    if T == seq_len:
        return x

    if T > seq_len:
        # Random crop start in [0, T - seq_len], drawn in plain JAX
        # (mirrors random.randint in the PyTorch module).
        start = jax.random.randint(key, (1,), 0, T - seq_len + 1, dtype=jnp.int32)
        x2 = x[:, None] if unsqueezed else x        # (T, 1) or (T, C)
        C = x2.shape[1]
        out = pl.pallas_call(
            functools.partial(_crop_hbm_kernel, seq_len=seq_len),
            out_shape=jax.ShapeDtypeStruct((seq_len, C), x2.dtype),
            grid_spec=pltpu.PrefetchScalarGridSpec(
                num_scalar_prefetch=1,                          # start -> SMEM
                grid=(1,),
                in_specs=[pl.BlockSpec(memory_space=pl.ANY)],   # x stays in HBM
                out_specs=pl.BlockSpec(memory_space=pl.ANY),    # out stays in HBM
                scratch_shapes=[pltpu.SemaphoreType.DMA(())],
            ),
            compiler_params=pltpu.CompilerParams(
                dimension_semantics=("arbitrary",)),
            cost_estimate=pl.CostEstimate(
                flops=0, transcendentals=0,
                bytes_accessed=2 * seq_len * C * itemsize),
        )(start, x2)
        return out[:, 0] if unsqueezed else out

    # T < seq_len: zero-pad the tail.  Blocks are small (< seq_len rows), so
    # whole-array VMEM blocks are fine.
    if unsqueezed:
        x2 = x[None, :]                             # (1, T), lane-dense
        time_axis = 1
        out_shape = (1, seq_len)
    else:
        x2 = x
        time_axis = 0
        out_shape = (seq_len, x.shape[1])
    padlen = seq_len - T
    zero_first = not _pad_slices_aligned(T, padlen, time_axis)
    out = pl.pallas_call(
        functools.partial(_pad_kernel, time_axis=time_axis, zero_first=zero_first),
        out_shape=jax.ShapeDtypeStruct(out_shape, x2.dtype),
        grid=(1,),
        in_specs=[pl.BlockSpec(x2.shape, lambda i: (0, 0))],
        out_specs=pl.BlockSpec(out_shape, lambda i: (0, 0)),
        cost_estimate=pl.CostEstimate(
            flops=0, transcendentals=0,
            bytes_accessed=(x2.size + out_shape[0] * out_shape[1]) * itemsize),
    )(x2)
    return out[0] if unsqueezed else out


def my_crop_batched(x, seq_len, key, *, samples_per_step=8):
    """Batched MyCrop: x (B, T, C) -> (B, seq_len, C), independent start per sample."""
    B, T, C = x.shape
    itemsize = x.dtype.itemsize

    if T == seq_len:
        return x

    if T > seq_len:
        starts = jax.random.randint(key, (B,), 0, T - seq_len + 1, dtype=jnp.int32)
        chunk = max(1, min(samples_per_step, B))
        if B >= 2:
            # Keep >= 2 grid steps so v7x's two TensorCores both get work.
            chunk = min(chunk, pl.cdiv(B, 2))
        num_chunks = pl.cdiv(B, chunk)
        return pl.pallas_call(
            functools.partial(_batched_crop_kernel, seq_len=seq_len,
                              chunk=chunk, batch=B),
            out_shape=jax.ShapeDtypeStruct((B, seq_len, C), x.dtype),
            grid_spec=pltpu.PrefetchScalarGridSpec(
                num_scalar_prefetch=1,                          # starts -> SMEM
                grid=(num_chunks,),
                in_specs=[pl.BlockSpec(memory_space=pl.ANY)],   # x stays in HBM
                out_specs=pl.BlockSpec(memory_space=pl.ANY),    # out stays in HBM
                scratch_shapes=[pltpu.SemaphoreType.DMA((chunk,))],
            ),
            compiler_params=pltpu.CompilerParams(
                dimension_semantics=("parallel",)),
            cost_estimate=pl.CostEstimate(
                flops=0, transcendentals=0,
                bytes_accessed=2 * B * seq_len * C * itemsize),
        )(starts, x)

    # T < seq_len: chunk samples per block to amortize per-step overhead.
    bblk = max(1, min(samples_per_step, B))
    padlen = seq_len - T
    zero_first = not _pad_slices_aligned(T, padlen, 0)
    return pl.pallas_call(
        functools.partial(_batched_pad_kernel, zero_first=zero_first),
        out_shape=jax.ShapeDtypeStruct((B, seq_len, C), x.dtype),
        grid=(pl.cdiv(B, bblk),),
        in_specs=[pl.BlockSpec((bblk, T, C), lambda g: (g, 0, 0))],
        out_specs=pl.BlockSpec((bblk, seq_len, C), lambda g: (g, 0, 0)),
        compiler_params=pltpu.CompilerParams(
            dimension_semantics=("parallel",)),
        cost_estimate=pl.CostEstimate(
            flops=0, transcendentals=0,
            bytes_accessed=B * (T + seq_len) * C * itemsize),
    )(x)


# ---------------------------------------------------------------------------
# Self-test
# ---------------------------------------------------------------------------

if __name__ == "__main__":
    root = jax.random.PRNGKey(0)
    (k_d1, k_d2, k_d3, k_d4, k_db, k_dbp,
     k_c1, k_c3, k_cb) = jax.random.split(root, 9)

    seq_len = 16
    C = 16

    # Case 1: T > seq_len, 2-D input -> random-start crop (single HBM->HBM DMA).
    T1 = 24
    x_long = jax.random.normal(k_d1, (T1, C), dtype=jnp.float32)
    y_long = my_crop(x_long, seq_len, k_c1)
    jax.block_until_ready(y_long)
    start1 = int(jax.random.randint(k_c1, (1,), 0, T1 - seq_len + 1,
                                    dtype=jnp.int32)[0])
    assert y_long.shape == (seq_len, C)
    assert bool(jnp.array_equal(y_long, x_long[start1:start1 + seq_len, :]))

    # Case 2: T < seq_len, 2-D input -> zero-pad tail.
    T2 = 10
    x_short = jax.random.normal(k_d2, (T2, C), dtype=jnp.float32)
    y_short = my_crop(x_short, seq_len, k_c1)
    jax.block_until_ready(y_short)
    assert y_short.shape == (seq_len, C)
    assert bool(jnp.array_equal(y_short[:T2], x_short))
    assert bool(jnp.all(y_short[T2:] == 0.0))

    # Case 3: 1-D input (mapped to (T, 1), leading-axis window DMA), T > seq_len.
    T3 = 20
    x_1d = jax.random.normal(k_d3, (T3,), dtype=jnp.float32)
    y_1d = my_crop(x_1d, seq_len, k_c3)
    jax.block_until_ready(y_1d)
    start3 = int(jax.random.randint(k_c3, (1,), 0, T3 - seq_len + 1,
                                    dtype=jnp.int32)[0])
    assert y_1d.shape == (seq_len,)
    assert bool(jnp.array_equal(y_1d, x_1d[start3:start3 + seq_len]))

    # Case 4: T == seq_len -> identity short-circuit (no kernel).
    x_eq = jax.random.normal(k_d4, (seq_len, C), dtype=jnp.float32)
    y_eq = my_crop(x_eq, seq_len, k_c1)
    jax.block_until_ready(y_eq)
    assert bool(jnp.array_equal(y_eq, x_eq))

    # Case 5: batched crop, per-sample random starts, chunked DMAs in flight.
    B, T5 = 4, 32
    x_b = jax.random.normal(k_db, (B, T5, C), dtype=jnp.float32)
    y_b = my_crop_batched(x_b, seq_len, k_cb)
    jax.block_until_ready(y_b)
    starts_b = jax.random.randint(k_cb, (B,), 0, T5 - seq_len + 1, dtype=jnp.int32)
    assert y_b.shape == (B, seq_len, C)
    for b in range(B):
        s = int(starts_b[b])
        assert bool(jnp.array_equal(y_b[b], x_b[b, s:s + seq_len, :]))

    # Case 6: 1-D input, T < seq_len -> lane-dense zero-pad.
    T6 = 9
    x_1d_short = jax.random.normal(k_d2, (T6,), dtype=jnp.float32)
    y_1d_short = my_crop(x_1d_short, seq_len, k_c1)
    jax.block_until_ready(y_1d_short)
    assert y_1d_short.shape == (seq_len,)
    assert bool(jnp.array_equal(y_1d_short[:T6], x_1d_short))
    assert bool(jnp.all(y_1d_short[T6:] == 0.0))

    # Case 7: batched pad, multiple samples per block.
    T7 = 10
    x_bp = jax.random.normal(k_dbp, (B, T7, C), dtype=jnp.float32)
    y_bp = my_crop_batched(x_bp, seq_len, k_cb)
    jax.block_until_ready(y_bp)
    assert y_bp.shape == (B, seq_len, C)
    assert bool(jnp.array_equal(y_bp[:, :T7, :], x_bp))
    assert bool(jnp.all(y_bp[:, T7:, :] == 0.0))

    print("KERNEL_OK")
</pallas_src>

<mosaic_0001>
module attributes {stable_mosaic.version = 11 : i64} {
  func.func @_crop_hbm_kernel(%arg0: i32, %arg1: memref<1xi32, #tpu.memory_space<smem>>, %arg2: memref<24x16xf32, #tpu.memory_space<any>>, %arg3: memref<16x16xf32, #tpu.memory_space<any>>, %arg4: memref<!tpu.dma_semaphore, #tpu.memory_space<semaphore_mem>>) attributes {dimension_semantics = [#tpu.dimension_semantics<arbitrary>], iteration_bounds = array<i64: 1>, scalar_prefetch = 1 : i64, scratch_operands = 1 : i64, tpu.core_type = #tpu.core_type<tc>, window_params = [{}, {}]} {
    %c0 = arith.constant 0 : index
    %0 = memref.load %arg1[%c0] : memref<1xi32, #tpu.memory_space<smem>>
    %c0_i32 = arith.constant 0 : i32
    %1 = tpu.memref_slice %arg2[%0, %c0_i32] : memref<24x16xf32, #tpu.memory_space<any>> -> memref<16x16xf32, #tpu.memory_space<any>>
    tpu.enqueue_dma source(%1 : memref<16x16xf32, #tpu.memory_space<any>>) target(%arg3 : memref<16x16xf32, #tpu.memory_space<any>>) target_semaphore(%arg4 : memref<!tpu.dma_semaphore, #tpu.memory_space<semaphore_mem>>)
    %c0_i32_0 = arith.constant 0 : i32
    %2 = tpu.memref_slice %arg2[%0, %c0_i32_0] : memref<24x16xf32, #tpu.memory_space<any>> -> memref<16x16xf32, #tpu.memory_space<any>>
    tpu.wait_dma2 semaphore(%arg4 : memref<!tpu.dma_semaphore, #tpu.memory_space<semaphore_mem>>) src(%2 : memref<16x16xf32, #tpu.memory_space<any>>) dst(%arg3 : memref<16x16xf32, #tpu.memory_space<any>>)
    return
  }
}

</mosaic_0001>

<llo_original>
// kernel: tpu_custom_call.1
$region0: #{tpu_custom_call.1}
  #allocation0 [shape = 'u32[]', space=smem, size = 0x4, offset = 0x4, fixed_abs, tag = 'smem constant byte address 0x4 - core index']
  #allocation1 [shape = 'u32[144,128]{1,0:T(1,128)}', space=vmem, size = 0x12000, scoped, tag = 'internal scratch']
  #allocation2 [shape = 's32[1]{0}', space=sflag, size = 0x4, scoped, tag = 'scratch operand']
  #allocation3 [shape = 's32[1]{0}', space=sflag, size = 0x4, scoped, tag = 'scoped memory for tpu_custom_call.1']
  #allocation4 [shape = 's32[1]{0:T(128)S(6)}', space=smem, size = 0x200, scoped, tag = 'prefetched SMEM operand 0']
  #allocation5 [shape = 's32[]', space=sflag, size = 0x4, offset = 0, fixed_abs, tag = 'sflag constant byte address 0x0 - dummy sync flag']
  #allocation6 [shape = 's32[]', space=sflag, size = 0x4, offset = 0, fixed_abs, tag = 'sflag constant byte address 0x0 - dummy sync flag']
  #allocation7 [shape = 'u32[]', space=smem, size = 0x4, offset = 0x44, fixed_abs, tag = 'smem constant byte address 0x44 - assertion arg 0']
  #allocation8 [shape = 'u32[]', space=smem, size = 0x4, offset = 0x48, fixed_abs, tag = 'smem constant byte address 0x48 - assertion arg 1']
  %s0 = inlined_call_operand.<no memory space> [shape: s32[1], index: 0, kind: input, shape index: {}]
  %s1 = inlined_call_operand.vmem [shape: f32[24,16], index: 1, kind: input, shape index: {}]
  %s2 = inlined_call_operand.hbm [shape: f32[16,16], index: 2, kind: output, shape index: {}]
  %s3 = sld [smem:[#allocation0]]
  $region6: #{tpu_custom_call.1} parent=0
    _
  %s5 = ssub.s32 1, %s3
  %s6 = scalar_select 0, %s5, %s3
  %7 = sst [smem:[#allocation4]] %s0
  %s8 = sld [smem:[#allocation4]]
  %s9 = scalar_lea.vmem %s1, %s8
  // Predicated region
  $region2: #{tpu_custom_call.1} parent=0 // pred_check
    _
  $region3: #{tpu_custom_call.1} parent=0 // pred_check_branch
    %11 = sbr.rel target = $region5
  $region4: #{tpu_custom_call.1} parent=0 // pred_region
    %12 = sst [smem:[#allocation7]] [#allocation6]
    %13 = sst [smem:[#allocation8]] [#allocation5]
  $region5: #{tpu_custom_call.1} parent=0 // pred_fallthru
    _
  %15 = shalt.err (0)
  %s17 = sshll.u32 %s9, 4
  %s18 = int_to_ptr.vmem [resolvable:$true] %s17
  %20 = dma.vmem_to_hbm [thread:$0]  %s18, 256, %s2, [#allocation2]
  %s21 = smul.u32 16, 1
  %s22 = sshll.u32 %s21, 4
  %23 = dma.done [#allocation2], %s22
  %24 = vsyncmov [#allocation2]
  %s25 = vpop.sfrf %24
  %p26 = scmp.eq.s32.totalorder %s25, 0
  %p27 = pneg %p26
  %29 = shalt.err (%p27)

</llo_original>
